<compile_context>
chip_gen: v7x
topology: tpu7x:2x2x1
jax: 0.10.0
libtpu: 0.0.40
codegen_flags: <defaults>
</compile_context>

<pallas_src>
import jax
import jax.numpy as jnp
from jax import lax
from jax.experimental import pallas as pl
from jax.experimental.pallas import tpu as pltpu


# ------------------------------ helpers ------------------------------------

def _pick_row_tile(m, pref=256):
    """Largest row tile <= pref that divides m (multiple of 8 preferred)."""
    if m <= pref:
        return m
    t = (pref // 8) * 8
    while t >= 8:
        if m % t == 0:
            return t
        t -= 8
    for t in range(pref, 0, -1):
        if m % t == 0:
            return t
    return m


def _layernorm_f32(x, gamma, beta):
    mu = jnp.mean(x, axis=-1, keepdims=True)
    xc = x - mu
    var = jnp.mean(xc * xc, axis=-1, keepdims=True)
    return xc * lax.rsqrt(var + 1e-5) * gamma + beta


# --------------------- kernel 1: LN1 + fused QKV projection -----------------

def _ln_qkv_kernel(x_ref, g_ref, b_ref, w_ref, bias_ref, o_ref):
    x = x_ref[...].astype(jnp.float32)                         # (TM, D) f32
    xn = _layernorm_f32(x, g_ref[...], b_ref[...]).astype(jnp.bfloat16)
    y = jnp.dot(xn, w_ref[...], preferred_element_type=jnp.float32)
    o_ref[...] = (y + bias_ref[...]).astype(o_ref.dtype)       # (TM, 3D) bf16


def ln_qkv(x2d, gamma, beta, w_qkv, b_qkv):
    """x2d: [M,D] f32; w_qkv: [D,3D] bf16; b_qkv: [1,3D] f32 -> [M,3D] bf16."""
    M, D = x2d.shape
    N = w_qkv.shape[1]
    tm = _pick_row_tile(M)
    flops = 2 * M * D * N
    bytes_acc = x2d.size * 4 + w_qkv.size * 2 + M * N * 2
    return pl.pallas_call(
        _ln_qkv_kernel,
        out_shape=jax.ShapeDtypeStruct((M, N), jnp.bfloat16),
        grid=(M // tm,),
        in_specs=[
            pl.BlockSpec((tm, D), lambda i: (i, 0)),
            pl.BlockSpec((1, D), lambda i: (0, 0)),
            pl.BlockSpec((1, D), lambda i: (0, 0)),
            pl.BlockSpec((D, N), lambda i: (0, 0)),     # weight resident / streamed once
            pl.BlockSpec((1, N), lambda i: (0, 0)),
        ],
        out_specs=pl.BlockSpec((tm, N), lambda i: (i, 0)),
        compiler_params=pltpu.CompilerParams(dimension_semantics=("parallel",)),
        cost_estimate=pl.CostEstimate(flops=flops, transcendentals=0,
                                      bytes_accessed=bytes_acc),
    )(x2d, gamma, beta, w_qkv, b_qkv)


# --------------------- kernel 2: causal multi-head attention ----------------

def _attn_kernel(qkv_ref, o_ref, *, num_heads, head_dim, scale):
    S = qkv_ref.shape[1]
    D = num_heads * head_dim
    qkv = qkv_ref[0]                                           # (S, 3D) bf16

    # One 2-D causal additive bias shared across heads (f32 path only).
    row = lax.broadcasted_iota(jnp.int32, (S, S), 0)
    col = lax.broadcasted_iota(jnp.int32, (S, S), 1)
    mask_bias = jnp.where(col <= row, jnp.float32(0.0), jnp.float32(-1e30))

    outs = []
    for h in range(num_heads):
        lo = h * head_dim
        hi = lo + head_dim
        q = qkv[:, lo:hi]                                      # (S, Hd) bf16
        k = qkv[:, D + lo:D + hi]
        v = qkv[:, 2 * D + lo:2 * D + hi]
        # contract over Hd directly (no k transpose).
        s = lax.dot_general(q, k, (((1,), (1,)), ((), ())),
                            preferred_element_type=jnp.float32) * scale
        s = s + mask_bias
        m = jnp.max(s, axis=-1, keepdims=True)
        p = jnp.exp(s - m)
        l = jnp.sum(p, axis=-1, keepdims=True)
        p = p / l                                              # exact softmax normalization
        outs.append(jnp.dot(p.astype(v.dtype), v,
                            preferred_element_type=jnp.float32))
    o = jnp.concatenate(outs, axis=-1)                         # (S, D) lane-dense
    o_ref[0] = o.astype(o_ref.dtype)


def causal_attention(qkv, num_heads, head_dim, scale):
    """qkv: [B,S,3D] bf16 (columns q|k|v, head-contiguous) -> [B,S,D] bf16 (lane-dense)."""
    B, S, threeD = qkv.shape
    D = threeD // 3
    flops = 4 * B * num_heads * S * S * head_dim
    bytes_acc = qkv.size * 2 + B * S * D * 2

    def kern(qkv_ref, o_ref):
        _attn_kernel(qkv_ref, o_ref, num_heads=num_heads,
                     head_dim=head_dim, scale=scale)

    return pl.pallas_call(
        kern,
        out_shape=jax.ShapeDtypeStruct((B, S, D), jnp.bfloat16),
        grid=(B,),
        in_specs=[pl.BlockSpec((1, S, threeD), lambda b: (b, 0, 0))],
        out_specs=pl.BlockSpec((1, S, D), lambda b: (b, 0, 0)),
        compiler_params=pltpu.CompilerParams(dimension_semantics=("parallel",)),
        cost_estimate=pl.CostEstimate(flops=flops,
                                      transcendentals=B * num_heads * S * S,
                                      bytes_accessed=bytes_acc),
    )(qkv)


# --------------- kernel 3: Wo projection + bias + residual ------------------

def _attn_proj_kernel(a_ref, w_ref, bias_ref, res_ref, o_ref):
    y = jnp.dot(a_ref[...], w_ref[...], preferred_element_type=jnp.float32)
    o_ref[...] = y + bias_ref[...] + res_ref[...]


def attn_out_proj(attn2d, wo, bo, res2d):
    """attn2d: [M,D] bf16; wo: [D,D] bf16; bo: [1,D] f32; res2d: [M,D] f32 -> [M,D] f32."""
    M, D = attn2d.shape
    tm = _pick_row_tile(M)
    flops = 2 * M * D * D
    bytes_acc = attn2d.size * 2 + wo.size * 2 + 2 * M * D * 4
    return pl.pallas_call(
        _attn_proj_kernel,
        out_shape=jax.ShapeDtypeStruct((M, D), jnp.float32),
        grid=(M // tm,),
        in_specs=[
            pl.BlockSpec((tm, D), lambda i: (i, 0)),
            pl.BlockSpec((D, D), lambda i: (0, 0)),
            pl.BlockSpec((1, D), lambda i: (0, 0)),
            pl.BlockSpec((tm, D), lambda i: (i, 0)),
        ],
        out_specs=pl.BlockSpec((tm, D), lambda i: (i, 0)),
        compiler_params=pltpu.CompilerParams(dimension_semantics=("parallel",)),
        cost_estimate=pl.CostEstimate(flops=flops, transcendentals=0,
                                      bytes_accessed=bytes_acc),
    )(attn2d, wo, bo, res2d)


# --------------------- kernel 4: LN2 + W1 + QuickGELU -----------------------

def _ln_mlp_kernel(x_ref, g_ref, b_ref, w_ref, bias_ref, o_ref):
    x = x_ref[...].astype(jnp.float32)
    xn = _layernorm_f32(x, g_ref[...], b_ref[...]).astype(jnp.bfloat16)
    y = jnp.dot(xn, w_ref[...], preferred_element_type=jnp.float32) + bias_ref[...]
    y = y * jax.nn.sigmoid(1.702 * y)                          # QuickGELU (f32)
    o_ref[...] = y.astype(o_ref.dtype)


def ln_mlp_gelu(x2d, gamma, beta, w1, b1):
    """x2d: [M,D] f32; w1: [D,N] bf16; b1: [1,N] f32 -> [M,N] bf16."""
    M, D = x2d.shape
    N = w1.shape[1]
    tm = _pick_row_tile(M)
    flops = 2 * M * D * N
    bytes_acc = x2d.size * 4 + w1.size * 2 + M * N * 2
    return pl.pallas_call(
        _ln_mlp_kernel,
        out_shape=jax.ShapeDtypeStruct((M, N), jnp.bfloat16),
        grid=(M // tm,),
        in_specs=[
            pl.BlockSpec((tm, D), lambda i: (i, 0)),
            pl.BlockSpec((1, D), lambda i: (0, 0)),
            pl.BlockSpec((1, D), lambda i: (0, 0)),
            pl.BlockSpec((D, N), lambda i: (0, 0)),
            pl.BlockSpec((1, N), lambda i: (0, 0)),
        ],
        out_specs=pl.BlockSpec((tm, N), lambda i: (i, 0)),
        compiler_params=pltpu.CompilerParams(dimension_semantics=("parallel",)),
        cost_estimate=pl.CostEstimate(flops=flops, transcendentals=M * N,
                                      bytes_accessed=bytes_acc),
    )(x2d, gamma, beta, w1, b1)


# --------------------- kernel 5: W2 + bias + residual -----------------------

def _mlp_out_kernel(m_ref, w_ref, bias_ref, res_ref, o_ref):
    y = jnp.dot(m_ref[...], w_ref[...], preferred_element_type=jnp.float32)
    o_ref[...] = y + bias_ref[...] + res_ref[...]


def mlp_out_proj(m2d, w2, b2, res2d):
    """m2d: [M,K] bf16; w2: [K,D] bf16; b2: [1,D] f32; res2d: [M,D] f32 -> [M,D] f32."""
    M, K = m2d.shape
    D = w2.shape[1]
    tm = _pick_row_tile(M)
    flops = 2 * M * K * D
    bytes_acc = m2d.size * 2 + w2.size * 2 + 2 * M * D * 4
    return pl.pallas_call(
        _mlp_out_kernel,
        out_shape=jax.ShapeDtypeStruct((M, D), jnp.float32),
        grid=(M // tm,),
        in_specs=[
            pl.BlockSpec((tm, K), lambda i: (i, 0)),
            pl.BlockSpec((K, D), lambda i: (0, 0)),
            pl.BlockSpec((1, D), lambda i: (0, 0)),
            pl.BlockSpec((tm, D), lambda i: (i, 0)),
        ],
        out_specs=pl.BlockSpec((tm, D), lambda i: (i, 0)),
        compiler_params=pltpu.CompilerParams(dimension_semantics=("parallel",)),
        cost_estimate=pl.CostEstimate(flops=flops, transcendentals=0,
                                      bytes_accessed=bytes_acc),
    )(m2d, w2, b2, res2d)


# --------------------------- final LayerNorm --------------------------------

def _ln_kernel(x_ref, g_ref, b_ref, o_ref):
    x = x_ref[...].astype(jnp.float32)
    o_ref[...] = _layernorm_f32(x, g_ref[...], b_ref[...]).astype(o_ref.dtype)


def layernorm(x2d, gamma, beta):
    M, D = x2d.shape
    tm = _pick_row_tile(M)
    return pl.pallas_call(
        _ln_kernel,
        out_shape=jax.ShapeDtypeStruct((M, D), x2d.dtype),
        grid=(M // tm,),
        in_specs=[
            pl.BlockSpec((tm, D), lambda i: (i, 0)),
            pl.BlockSpec((1, D), lambda i: (0, 0)),
            pl.BlockSpec((1, D), lambda i: (0, 0)),
        ],
        out_specs=pl.BlockSpec((tm, D), lambda i: (i, 0)),
        compiler_params=pltpu.CompilerParams(dimension_semantics=("parallel",)),
    )(x2d, gamma, beta)


# --------------------------- CLIP text transformer --------------------------

def init_params(key, vocab_size, max_len, d_model, num_heads, num_layers):
    d_mlp = 4 * d_model
    keys = jax.random.split(key, 2 + num_layers)
    std = 0.02
    params = {
        "token_embedding": jax.random.normal(keys[0], (vocab_size, d_model), jnp.float32) * std,
        "position_embedding": jax.random.normal(keys[1], (max_len, d_model), jnp.float32) * std,
        "layers": [],
        "final_ln_g": jnp.ones((d_model,), jnp.float32),
        "final_ln_b": jnp.zeros((d_model,), jnp.float32),
        "num_heads": num_heads,
    }
    for li in range(num_layers):
        kq, kk, kv, ko, k1, k2 = jax.random.split(keys[2 + li], 6)
        params["layers"].append({
            "ln1_g": jnp.ones((d_model,), jnp.float32),
            "ln1_b": jnp.zeros((d_model,), jnp.float32),
            "wq": jax.random.normal(kq, (d_model, d_model), jnp.float32) * std,
            "bq": jnp.zeros((d_model,), jnp.float32),
            "wk": jax.random.normal(kk, (d_model, d_model), jnp.float32) * std,
            "bk": jnp.zeros((d_model,), jnp.float32),
            "wv": jax.random.normal(kv, (d_model, d_model), jnp.float32) * std,
            "bv": jnp.zeros((d_model,), jnp.float32),
            "wo": jax.random.normal(ko, (d_model, d_model), jnp.float32) * std,
            "bo": jnp.zeros((d_model,), jnp.float32),
            "ln2_g": jnp.ones((d_model,), jnp.float32),
            "ln2_b": jnp.zeros((d_model,), jnp.float32),
            "w1": jax.random.normal(k1, (d_model, d_mlp), jnp.float32) * std,
            "b1": jnp.zeros((d_mlp,), jnp.float32),
            "w2": jax.random.normal(k2, (d_mlp, d_model), jnp.float32) * std,
            "b2": jnp.zeros((d_model,), jnp.float32),
        })
    return params


def pack_params(params):
    """One-time repack of the frozen weights into kernel-friendly layouts / bf16."""
    D = params["token_embedding"].shape[1]
    bf16 = jnp.bfloat16
    packed_layers = []
    for layer in params["layers"]:
        # q|k|v concatenated on the output-column (lane) axis -> one lane-dense matmul.
        w_qkv = jnp.concatenate([layer["wq"], layer["wk"], layer["wv"]], axis=1).astype(bf16)
        b_qkv = jnp.concatenate([layer["bq"], layer["bk"], layer["bv"]]).reshape(1, 3 * D)
        packed_layers.append({
            "ln1_g": layer["ln1_g"].reshape(1, D),
            "ln1_b": layer["ln1_b"].reshape(1, D),
            "w_qkv": w_qkv,                                   # [D, 3D] bf16
            "b_qkv": b_qkv,                                   # [1, 3D] f32
            "wo": layer["wo"].astype(bf16),                   # [D, D] bf16
            "bo": layer["bo"].reshape(1, D),
            "ln2_g": layer["ln2_g"].reshape(1, D),
            "ln2_b": layer["ln2_b"].reshape(1, D),
            "w1": layer["w1"].astype(bf16),                   # [D, 4D] bf16
            "b1": layer["b1"].reshape(1, -1),
            "w2": layer["w2"].astype(bf16),                   # [4D, D] bf16
            "b2": layer["b2"].reshape(1, D),
        })
    return {
        "token_embedding": params["token_embedding"],
        "position_embedding": params["position_embedding"],
        "layers": packed_layers,
        "final_ln_g": params["final_ln_g"].reshape(1, D),
        "final_ln_b": params["final_ln_b"].reshape(1, D),
        "num_heads": params["num_heads"],
    }


def frozen_clip_embedder_forward(packed, input_ids):
    """Returns last_hidden_state z: [B, S, D] (the FrozenCLIPEmbedder output)."""
    B, S = input_ids.shape
    tok_emb = packed["token_embedding"]
    pos_emb = packed["position_embedding"]
    D = tok_emb.shape[1]
    H = packed["num_heads"]
    Hd = D // H
    scale = float(Hd) ** -0.5

    # Embedding lookup (gather) — glue, kept in plain JAX.
    h = jnp.take(tok_emb, input_ids, axis=0) + pos_emb[None, :S, :]      # [B, S, D] f32
    x2d = h.reshape(B * S, D)                                            # token stream

    for layer in packed["layers"]:
        # --- self-attention block (pre-LN, causal), fully fused ---
        qkv = ln_qkv(x2d, layer["ln1_g"], layer["ln1_b"],
                     layer["w_qkv"], layer["b_qkv"])                     # [B*S, 3D] bf16
        attn = causal_attention(qkv.reshape(B, S, 3 * D), H, Hd, scale)  # [B, S, D] bf16
        x2d = attn_out_proj(attn.reshape(B * S, D),
                            layer["wo"], layer["bo"], x2d)               # [B*S, D] f32 (+res)
        # --- MLP block (pre-LN, QuickGELU), fully fused ---
        m = ln_mlp_gelu(x2d, layer["ln2_g"], layer["ln2_b"],
                        layer["w1"], layer["b1"])                        # [B*S, 4D] bf16
        x2d = mlp_out_proj(m, layer["w2"], layer["b2"], x2d)             # [B*S, D] f32 (+res)

    z2d = layernorm(x2d, packed["final_ln_g"], packed["final_ln_b"])
    return z2d.reshape(B, S, D)


# --------------------------------- main -------------------------------------

if __name__ == "__main__":
    # Small, forward-consistent shapes: batch=2, seq(max_length)=8, hidden=32,
    # heads=4, layers=2, vocab=1000.
    B, S, D, H, L, V = 2, 8, 32, 4, 2, 1000

    key = jax.random.PRNGKey(0)
    k_param, k_tok = jax.random.split(key)
    params = init_params(k_param, vocab_size=V, max_len=S, d_model=D,
                         num_heads=H, num_layers=L)
    packed = pack_params(params)

    # Synthetic "tokenized text" (the tokenizer itself is not a tensor op).
    input_ids = jax.random.randint(k_tok, (B, S), 0, V, dtype=jnp.int32)

    z = frozen_clip_embedder_forward(packed, input_ids)
    z = jax.block_until_ready(z)

    assert z.shape == (B, S, D), z.shape
    assert z.dtype == jnp.float32
    assert bool(jnp.all(jnp.isfinite(z)))
    print("KERNEL_OK")
</pallas_src>

<mosaic_0001>
module attributes {stable_mosaic.version = 11 : i64} {
  func.func @_ln_qkv_kernel(%arg0: i32, %arg1: memref<16x32xf32, #tpu.memory_space<vmem>>, %arg2: memref<1x32xf32, #tpu.memory_space<vmem>>, %arg3: memref<1x32xf32, #tpu.memory_space<vmem>>, %arg4: memref<32x96xbf16, #tpu.memory_space<vmem>>, %arg5: memref<1x96xf32, #tpu.memory_space<vmem>>, %arg6: memref<16x96xbf16, #tpu.memory_space<vmem>>) attributes {dimension_semantics = [#tpu.dimension_semantics<parallel>], iteration_bounds = array<i64: 1>, scalar_prefetch = 0 : i64, scratch_operands = 0 : i64, tpu.core_type = #tpu.core_type<tc>, window_params = [{transform_indices = @transform_0, window_bounds = array<i64: 16, 32>}, {pipeline_mode = #tpu.pipeline_mode<synchronous>, transform_indices = @transform_1, window_bounds = array<i64: 1, 32>}, {pipeline_mode = #tpu.pipeline_mode<synchronous>, transform_indices = @transform_2, window_bounds = array<i64: 1, 32>}, {pipeline_mode = #tpu.pipeline_mode<synchronous>, transform_indices = @transform_3, window_bounds = array<i64: 32, 96>}, {pipeline_mode = #tpu.pipeline_mode<synchronous>, transform_indices = @transform_4, window_bounds = array<i64: 1, 96>}, {transform_indices = @transform_5, window_bounds = array<i64: 16, 96>}]} {
    %c0 = arith.constant 0 : index
    %c0_0 = arith.constant 0 : index
    %0 = vector.load %arg1[%c0, %c0_0] : memref<16x32xf32, #tpu.memory_space<vmem>>, vector<16x32xf32>
    %c0_1 = arith.constant 0 : index
    %c0_2 = arith.constant 0 : index
    %1 = vector.load %arg2[%c0_1, %c0_2] : memref<1x32xf32, #tpu.memory_space<vmem>>, vector<1x32xf32>
    %c0_3 = arith.constant 0 : index
    %c0_4 = arith.constant 0 : index
    %2 = vector.load %arg3[%c0_3, %c0_4] : memref<1x32xf32, #tpu.memory_space<vmem>>, vector<1x32xf32>
    %cst = arith.constant dense<0.000000e+00> : vector<16xf32>
    %3 = vector.multi_reduction <add>, %0, %cst [1] : vector<16x32xf32> to vector<16xf32>
    %4 = vector.shape_cast %3 : vector<16xf32> to vector<16x1xf32>
    %cst_5 = arith.constant 3.200000e+01 : f32
    %5 = vector.broadcast %cst_5 : f32 to vector<16x1xf32>
    %6 = arith.divf %4, %5 : vector<16x1xf32>
    %7 = vector.broadcast %6 : vector<16x1xf32> to vector<16x32xf32>
    %8 = arith.subf %0, %7 : vector<16x32xf32>
    %9 = arith.mulf %8, %8 : vector<16x32xf32>
    %cst_6 = arith.constant dense<0.000000e+00> : vector<16xf32>
    %10 = vector.multi_reduction <add>, %9, %cst_6 [1] : vector<16x32xf32> to vector<16xf32>
    %11 = vector.shape_cast %10 : vector<16xf32> to vector<16x1xf32>
    %cst_7 = arith.constant 3.200000e+01 : f32
    %12 = vector.broadcast %cst_7 : f32 to vector<16x1xf32>
    %13 = arith.divf %11, %12 : vector<16x1xf32>
    %cst_8 = arith.constant 9.99999974E-6 : f32
    %14 = vector.broadcast %cst_8 : f32 to vector<16x1xf32>
    %15 = arith.addf %13, %14 : vector<16x1xf32>
    %16 = math.rsqrt %15 : vector<16x1xf32>
    %17 = vector.broadcast %16 : vector<16x1xf32> to vector<16x32xf32>
    %18 = arith.mulf %8, %17 : vector<16x32xf32>
    %19 = vector.broadcast %1 : vector<1x32xf32> to vector<16x32xf32>
    %20 = arith.mulf %18, %19 : vector<16x32xf32>
    %21 = vector.broadcast %2 : vector<1x32xf32> to vector<16x32xf32>
    %22 = arith.addf %20, %21 : vector<16x32xf32>
    %23 = arith.truncf %22 : vector<16x32xf32> to vector<16x32xbf16>
    %c0_9 = arith.constant 0 : index
    %c0_10 = arith.constant 0 : index
    %24 = vector.load %arg4[%c0_9, %c0_10] : memref<32x96xbf16, #tpu.memory_space<vmem>>, vector<32x96xbf16>
    %cst_11 = arith.constant dense<0.000000e+00> : vector<16x96xf32>
    %25 = tpu.matmul %23, %24, %cst_11 {dimension_numbers = #tpu.dot_dimension_numbers<[1], [0], [0], [1], [0, 0, 1, 1], [], []>} : vector<16x32xbf16>, vector<32x96xbf16>, vector<16x96xf32> -> vector<16x96xf32>
    %c0_12 = arith.constant 0 : index
    %c0_13 = arith.constant 0 : index
    %26 = vector.load %arg5[%c0_12, %c0_13] : memref<1x96xf32, #tpu.memory_space<vmem>>, vector<1x96xf32>
    %27 = vector.broadcast %26 : vector<1x96xf32> to vector<16x96xf32>
    %28 = arith.addf %25, %27 : vector<16x96xf32>
    %29 = arith.truncf %28 : vector<16x96xf32> to vector<16x96xbf16>
    %c0_14 = arith.constant 0 : index
    %c0_15 = arith.constant 0 : index
    %30 = vector.load %arg6[%c0_14, %c0_15] : memref<16x96xbf16, #tpu.memory_space<vmem>>, vector<16x96xbf16>
    tpu.vector_store %arg6[%c0_14, %c0_15], %29 {strides = array<i32>} : memref<16x96xbf16, #tpu.memory_space<vmem>>, vector<16x96xbf16>,
    return
  }
  func.func @transform_0(%arg0: i32) -> (i32, i32) {
    %c0_i32 = arith.constant 0 : i32
    %c0_i32_0 = arith.constant 0 : i32
    return %arg0, %c0_i32 : i32, i32
  }
  func.func @transform_1(%arg0: i32) -> (i32, i32) {
    %c0_i32 = arith.constant 0 : i32
    %c0_i32_0 = arith.constant 0 : i32
    %c0_i32_1 = arith.constant 0 : i32
    return %c0_i32, %c0_i32_0 : i32, i32
  }
  func.func @transform_2(%arg0: i32) -> (i32, i32) {
    %c0_i32 = arith.constant 0 : i32
    %c0_i32_0 = arith.constant 0 : i32
    %c0_i32_1 = arith.constant 0 : i32
    return %c0_i32, %c0_i32_0 : i32, i32
  }
  func.func @transform_3(%arg0: i32) -> (i32, i32) {
    %c0_i32 = arith.constant 0 : i32
    %c0_i32_0 = arith.constant 0 : i32
    %c0_i32_1 = arith.constant 0 : i32
    return %c0_i32, %c0_i32_0 : i32, i32
  }
  func.func @transform_4(%arg0: i32) -> (i32, i32) {
    %c0_i32 = arith.constant 0 : i32
    %c0_i32_0 = arith.constant 0 : i32
    %c0_i32_1 = arith.constant 0 : i32
    return %c0_i32, %c0_i32_0 : i32, i32
  }
  func.func @transform_5(%arg0: i32) -> (i32, i32) {
    %c0_i32 = arith.constant 0 : i32
    %c0_i32_0 = arith.constant 0 : i32
    return %arg0, %c0_i32 : i32, i32
  }
}

</mosaic_0001>

<llo_original>
// kernel: tpu_custom_call.1
$region0: #{tpu_custom_call.1}
  #allocation0 [shape = 'u32[]', space=smem, size = 0x4, offset = 0x4, fixed_abs, tag = 'smem constant byte address 0x4 - core index']
  #allocation1 [shape = 'u32[144,128]{1,0:T(1,128)}', space=vmem, size = 0x12000, scoped, tag = 'internal scratch']
  %s0 = inlined_call_operand.hbm [shape: f32[16,32], index: 0, kind: input, shape index: {}]
  %s1 = inlined_call_operand.vmem [shape: f32[1,32], index: 1, kind: input, shape index: {}]
  %s2 = inlined_call_operand.vmem [shape: f32[1,32], index: 2, kind: input, shape index: {}]
  %s3 = inlined_call_operand.hbm [shape: bf16[32,96], index: 3, kind: input, shape index: {}]
  %s4 = inlined_call_operand.vmem [shape: f32[1,96], index: 4, kind: input, shape index: {}]
  %s5 = inlined_call_operand.hbm [shape: bf16[16,96], index: 5, kind: output, shape index: {}]
  %s6 = sld [smem:[#allocation0]]
  $region38: #{tpu_custom_call.1} parent=0
    _
  %s8 = ssub.s32 1, %s6
  %s9 = scalar_select 0, %s8, %s6
  $region1: #{tpu_custom_call.1} parent=0
    #allocation2 [shape = 'u8[8192]{0}', space=vmem, size = 0x2000, scoped, tag = 'input window, operand 0, single buffered']
    #allocation3 [shape = 's32[1]{0}', space=sflag, size = 0x4, scoped, tag = 'scoped memory for tpu_custom_call.1']
    #allocation4 [shape = 's32[1]{0}', space=sflag, size = 0x4, scoped, tag = 'scoped memory for tpu_custom_call.1']
    #allocation5 [shape = 'u8[8192]{0}', space=vmem, size = 0x2000, scoped, tag = 'input window, operand 3, single buffered']
    #allocation6 [shape = 's32[1]{0}', space=sflag, size = 0x4, scoped, tag = 'scoped memory for tpu_custom_call.1']
    #allocation7 [shape = 'u8[4096]{0}', space=vmem, size = 0x1000, scoped, tag = 'output window, operand 0, single buffered']
    %10 = vsyncpa [#allocation3], 0
    %11 = vsyncpa [#allocation6], 0
    %12 = vsyncpa [#allocation4], 0
    // Predicated region
    $region2: #{tpu_custom_call.1} parent=1 // pred_check
      _
    $region3: #{tpu_custom_call.1} parent=1 // pred_check_branch
      %14 = sbr.rel (0) target = $region5
    $region4: #{tpu_custom_call.1} parent=1 // pred_region
      %s16 = ssub.s32 256, 256
      %17 = vsyncadd [#allocation3], %s16
      %s18 = sshll.u32 [#allocation2], 4
      %s19 = int_to_ptr.vmem [resolvable:$true] %s18
      %24 = dma.hbm_to_vmem [thread:$0]  %s0, 256, %s19, [#allocation3], 128, 128, 8
    $region5: #{tpu_custom_call.1} parent=1 // pred_fallthru
      _
    // Predicated region
    $region6: #{tpu_custom_call.1} parent=1 // pred_check
      _
    $region7: #{tpu_custom_call.1} parent=1 // pred_check_branch
      %26 = sbr.rel (0) target = $region9
    $region8: #{tpu_custom_call.1} parent=1 // pred_region
      _
    $region9: #{tpu_custom_call.1} parent=1 // pred_fallthru
      _
    // Predicated region
    $region10: #{tpu_custom_call.1} parent=1 // pred_check
      _
    $region11: #{tpu_custom_call.1} parent=1 // pred_check_branch
      %28 = sbr.rel (0) target = $region13
    $region12: #{tpu_custom_call.1} parent=1 // pred_region
      _
    $region13: #{tpu_custom_call.1} parent=1 // pred_fallthru
      _
    // Predicated region
    $region14: #{tpu_custom_call.1} parent=1 // pred_check
      _
    $region15: #{tpu_custom_call.1} parent=1 // pred_check_branch
      %30 = sbr.rel (0) target = $region17
    $region16: #{tpu_custom_call.1} parent=1 // pred_region
      %s32 = ssub.s32 256, 256
      %33 = vsyncadd [#allocation6], %s32
      %s34 = sshll.u32 [#allocation5], 4
      %s35 = int_to_ptr.vmem [resolvable:$true] %s34
      %40 = dma.hbm_to_vmem [thread:$0]  %s3, 256, %s35, [#allocation6], 64, 64, 4
    $region17: #{tpu_custom_call.1} parent=1 // pred_fallthru
      _
    // Predicated region
    $region18: #{tpu_custom_call.1} parent=1 // pred_check
      _
    $region19: #{tpu_custom_call.1} parent=1 // pred_check_branch
      %42 = sbr.rel (0) target = $region21
    $region20: #{tpu_custom_call.1} parent=1 // pred_region
      _
    $region21: #{tpu_custom_call.1} parent=1 // pred_fallthru
      _
    // Predicated region
    $region22: #{tpu_custom_call.1} parent=1 // pred_check
      _
    $region23: #{tpu_custom_call.1} parent=1 // pred_check_branch
      %44 = sbr.rel (0) target = $region25
    $region24: #{tpu_custom_call.1} parent=1 // pred_region
      %45 = dma.done [#allocation3], 256
    $region25: #{tpu_custom_call.1} parent=1 // pred_fallthru
      _
    // Predicated region
    $region26: #{tpu_custom_call.1} parent=1 // pred_check
      _
    $region27: #{tpu_custom_call.1} parent=1 // pred_check_branch
      %47 = sbr.rel (0) target = $region29
    $region28: #{tpu_custom_call.1} parent=1 // pred_region
      %48 = dma.done [#allocation6], 256
    $region29: #{tpu_custom_call.1} parent=1 // pred_fallthru
      _
    %v50 = vld [vmem:[#allocation2] sm:$0xff]
    %v51 = vld [vmem:[#allocation2 + $0x8] sm:$0xff]
    %v52 = vld [vmem:[%s1] sm:$0x1]
    %v53 = vld [vmem:[%s2] sm:$0x1]
    %vm54 = vcmask 261120
    %v55 = vsel %vm54, %v50, 0.0
    %56 = vadd.xlane.f32.xlu0 %v55
    %v57 = vpop.xlane.xlu0 %56
    %v58 = vsel %vm54, %v51, 0.0
    %59 = vadd.xlane.f32.xlu0 %v58
    %v60 = vpop.xlane.xlu0 %59
    %v61 = vrcp.pop 32.0
    %v62 = vmul.f32 %v57, %v61
    %v63 = vmul.f32 %v60, %v61
    %v64 = vsub.f32 %v50, %v62
    %v65 = vsub.f32 %v51, %v63
    %v66 = vmul.f32 %v64, %v64
    %v67 = vmul.f32 %v65, %v65
    %v68 = vsel %vm54, %v66, 0.0
    %69 = vadd.xlane.f32.xlu0 %v68
    %v70 = vpop.xlane.xlu0 %69
    %v71 = vsel %vm54, %v67, 0.0
    %72 = vadd.xlane.f32.xlu0 %v71
    %v73 = vpop.xlane.xlu0 %72
    %v74 = vmul.f32 %v70, %v61
    %v75 = vmul.f32 %v73, %v61
    %v76 = vadd.f32 %v74, 1e-05
    %v77 = vadd.f32 %v75, 1e-05
    %v78 = vrsqrt.pop %v76
    %v79 = vrsqrt.pop %v77
    %v80 = vmul.f32 %v64, %v78
    %v81 = vmul.f32 %v65, %v79
    %v83 = vlaneseq
    %v84 = vshrl.u32 %v83, 7
    %v85 = vsub.s32 0, %v84
    %v86 = vrot.slane %v52, %v85
    %v88 = vmul.f32 %v80, %v86
    %v89 = vmul.f32 %v81, %v86
    %v91 = vlaneseq
    %v92 = vshrl.u32 %v91, 7
    %v93 = vsub.s32 0, %v92
    %v94 = vrot.slane %v53, %v93
    %v96 = vadd.f32 %v88, %v94
    %v97 = vadd.f32 %v89, %v94
    %v98 = vpack.c.bf16 %v97, %v96
    %v99 = vld [vmem:[#allocation5] sm:$0xf]
    %v100 = vld [vmem:[#allocation5 + $0x4] sm:$0xf]
    %v101 = vld [vmem:[#allocation5 + $0x8] sm:$0xf]
    %v102 = vld [vmem:[#allocation5 + $0xc] sm:$0xf]
    %v103 = vld [vmem:[%s4] sm:$0x1]
    %v105 = vlaneseq
    %v106 = vshrl.u32 %v105, 7
    %v107 = vsub.s32 0, %v106
    %v108 = vrot.slane %v103, %v107
    %v114 = vunpack.c.l.b16 %v99
    %v115 = vunpack.c.l.b16 %v100
    %v116 = vunpack.c.l.b16 %v101
    %v117 = vunpack.c.l.b16 %v102
    %v118 = vpack.c.b16 %v115, %v114
    %v119 = vpack.c.b16 %v117, %v116
    %v123 = vsel %vm54, %v98, 0
    %125 = vmatprep.subr.bf16.mxu0 0
    %126 = vmatpush1.bf16.msra.mxu0 %v118
    %127 = vmatprep.subr.bf16.mxu0 0
    %128 = vmatpush1.bf16.msra.mxu0 %v119
    %129 = vmatprep.subr.bf16.mxu0 0
    %130 = vmatpush1.bf16.msra.mxu0 0
    %131 = vmatprep.subr.bf16.mxu0 0
    %132 = vmatpush1.bf16.msra.mxu0 0
    %133 = vmatprep.subr.bf16.mxu0 0
    %134 = vmatpush1.bf16.msra.mxu0 0
    %135 = vmatprep.subr.bf16.mxu0 0
    %136 = vmatpush1.bf16.msra.mxu0 0
    %137 = vmatprep.subr.bf16.mxu0 0
    %138 = vmatpush1.bf16.msra.mxu0 0
    %139 = vmatprep.subr.bf16.mxu0 0
    %140 = vmatpush1.bf16.msra.mxu0 0
    %141 = vmatprep.subr.bf16.mxu0 0
    %142 = vmatpush1.bf16.msra.mxu0 0
    %143 = vmatprep.subr.bf16.mxu0 0
    %144 = vmatpush1.bf16.msra.mxu0 0
    %145 = vmatprep.subr.bf16.mxu0 0
    %146 = vmatpush1.bf16.msra.mxu0 0
    %147 = vmatprep.subr.bf16.mxu0 0
    %148 = vmatpush1.bf16.msra.mxu0 0
    %149 = vmatprep.subr.bf16.mxu0 0
    %150 = vmatpush1.bf16.msra.mxu0 0
    %151 = vmatprep.subr.bf16.mxu0 0
    %152 = vmatpush1.bf16.msra.mxu0 0
    %153 = vmatprep.subr.bf16.mxu0 0
    %154 = vmatpush1.bf16.msra.mxu0 0
    %155 = vmatprep.subr.bf16.mxu0 0
    %156 = vmatpush1.bf16.msra.mxu0 0
    %157 = vmatprep.mubr.bf16.mxu0 0
    %158 = vmatmul.mubr.bf16.gmra.mrb[0].mxu0 %v123
    %v159 = vpop.f32.mrb[0].mxu0
    %v160 = vadd.f32 %v108, %v159
    %v161 = vpop.f32.mrb[0].mxu0
    %v162 = vpop.f32.mrb[0].mxu0
    %v163 = vadd.f32 %v108, %v162
    %v164 = vpop.f32.mrb[0].mxu0
    %165 = vdwg.mxu0
    %v166 = vpack.c.bf16 %v163, %v160
    %v168 = vunpack.c.l.b16 %v166
    %v169 = vunpack.c.h.b16 %v166
    %v170 = vpack.c.b16 %v168, %v168
    %v171 = vpack.c.b16 %v169, %v169
    %vm174 = vcmask 781312
    %175 = vst.msk [vmem:[#allocation7] sm:$0xf] %vm174, %v170
    %176 = vst.msk [vmem:[#allocation7 + $0x4] sm:$0xf] %vm174, %v171
    // Predicated region
    $region30: #{tpu_custom_call.1} parent=1 // pred_check
      _
    $region31: #{tpu_custom_call.1} parent=1 // pred_check_branch
      %178 = sbr.rel (0) target = $region33
    $region32: #{tpu_custom_call.1} parent=1 // pred_region
      %s180 = ssub.s32 128, 128
      %181 = vsyncadd [#allocation4], %s180
      %s182 = sshll.u32 [#allocation7], 4
      %s183 = int_to_ptr.vmem [resolvable:$true] %s182
      %188 = dma.vmem_to_hbm [thread:$0]  %s183, 128, %s5, [#allocation4], 64, 64, 4
    $region33: #{tpu_custom_call.1} parent=1 // pred_fallthru
      _
    // Predicated region
    $region34: #{tpu_custom_call.1} parent=1 // pred_check
      _
    $region35: #{tpu_custom_call.1} parent=1 // pred_check_branch
      %190 = sbr.rel (0) target = $region37
    $region36: #{tpu_custom_call.1} parent=1 // pred_region
      %191 = dma.done [#allocation4], 128
    $region37: #{tpu_custom_call.1} parent=1 // pred_fallthru
      _
    %192 = vsyncpa [#allocation3], 1
    %193 = vsyncpa [#allocation6], 1
    %194 = vsyncpa [#allocation4], 1

</llo_original>
